<compile_context>
chip_gen: v7x
topology: tpu7x:2x2x1
jax: 0.10.0
libtpu: 0.0.40
codegen_flags: <defaults>
</compile_context>

<pallas_src>
import functools
import math

import jax
import jax.numpy as jnp
from jax.experimental import pallas as pl
from jax.experimental.pallas import tpu as pltpu


def _pick_tile_h(h, c, w, itemsize, budget_bytes=2 * 1024 * 1024):
    """Largest TILE_H that divides H, is a multiple of 8 (or == H), and keeps
    the pred block within `budget_bytes`."""
    cands = [t for t in range(8, h + 1, 8) if h % t == 0]
    cands.append(h)  # full extent is always legal
    fitting = [t for t in cands if c * t * w * itemsize <= budget_bytes]
    return max(fitting) if fitting else min(cands)


def _ohem_pixel_kernel(pred_ref, tgt_ref, *out_refs, ignore_index, emit_loss):
    """Per-pixel log-softmax NLL over the leading class axis + fused per-tile
    partial sums.  pred_ref: (C, TH, W); tgt_ref: (TH, W) int32."""
    if emit_loss:
        num_ref, den_ref, loss_ref = out_refs
    else:
        num_ref, den_ref = out_refs

    x = pred_ref[...].astype(jnp.float32)             # (C, TH, W), upcast in-kernel
    tgt = tgt_ref[...]                                # (TH, W) int32

    valid = tgt != ignore_index                       # (TH, W) bool
    tgt_c = jnp.where(valid, tgt, 0)                  # clamp ignored to class 0

    # log-softmax over the leading class axis (VPU reductions, no XLU).
    m = jnp.max(x, axis=0)                            # (TH, W)
    s = jnp.sum(jnp.exp(x - m[None, :, :]), axis=0)   # (TH, W)

    # gather the target-class logit via select + reduce (no float one-hot mul).
    iota_c = jax.lax.broadcasted_iota(jnp.int32, x.shape, 0)          # (C, TH, W)
    x_t = jnp.sum(jnp.where(iota_c == tgt_c[None, :, :], x, 0.0), axis=0)

    nll = (m + jnp.log(s)) - x_t                      # -log softmax(pred)[target]
    loss = jnp.where(valid, nll, 0.0)                 # ignored pixels -> 0 (prob==1)

    # fused per-tile partial sums for the masked mean.
    num_ref[...] = jnp.sum(loss).reshape(1, 1)
    den_ref[...] = jnp.sum(valid.astype(jnp.float32)).reshape(1, 1)

    if emit_loss:
        loss_ref[...] = loss


def _ohem_keep_kernel(thr_ref, loss_ref, tgt_ref, num_ref, den_ref, *, ignore_index):
    """Per-tile partial sums of the OHEM-kept masked loss.
    thr_ref: (1, 1) f32 in SMEM (loss-space threshold); loss: (TH, W) f32;
    tgt: (TH, W) i32.  kept = valid & (loss >= thr)  <=>  valid & (prob <= exp(-thr))."""
    thr = thr_ref[0, 0]
    l = loss_ref[...]
    t = tgt_ref[...]
    keep = jnp.logical_and(t != ignore_index, l >= thr).astype(jnp.float32)
    num_ref[...] = jnp.sum(l * keep).reshape(1, 1)
    den_ref[...] = jnp.sum(keep).reshape(1, 1)


def ohem_cross_entropy(pred, target, *, ignore_index=255, thresh=0.7,
                       min_kept=1000000, tile_h=None):
    """pred: (B, C, H, W) float (any float dtype); target: (B, H, W) int.
    Returns the scalar OHEM cross-entropy loss (mean over kept pixels)."""
    min_kept = int(min_kept)
    thresh = float(thresh)
    b, c, h, w = pred.shape
    n = b * h * w

    tgt = target.astype(jnp.int32)
    itemsize = jnp.dtype(pred.dtype).itemsize

    if tile_h is None:
        tile_h = _pick_tile_h(h, c, w, itemsize)
    if h % tile_h != 0 or not (tile_h % 8 == 0 or tile_h == h):
        raise ValueError(f"tile_h={tile_h} must divide H={h} and be a multiple "
                         f"of 8 (or equal H)")
    nh = h // tile_h

    # OHEM branch can only ever fire if 0 < min_kept <= N (num_valid <= N).
    ohem_live = (min_kept > 0) and (min_kept <= n)

    part_spec = pl.BlockSpec((None, None, 1, 1), lambda bi, hi: (bi, hi, 0, 0))
    pix_spec = pl.BlockSpec((None, tile_h, w), lambda bi, hi: (bi, hi, 0))

    out_shape = [jax.ShapeDtypeStruct((b, nh, 1, 1), jnp.float32),
                 jax.ShapeDtypeStruct((b, nh, 1, 1), jnp.float32)]
    out_specs = [part_spec, part_spec]
    if ohem_live:
        out_shape.append(jax.ShapeDtypeStruct((b, h, w), jnp.float32))
        out_specs.append(pix_spec)

    outs = pl.pallas_call(
        functools.partial(_ohem_pixel_kernel, ignore_index=ignore_index,
                          emit_loss=ohem_live),
        out_shape=tuple(out_shape),
        grid=(b, nh),
        in_specs=[
            pl.BlockSpec((None, c, tile_h, w), lambda bi, hi: (bi, 0, hi, 0)),
            pl.BlockSpec((None, tile_h, w), lambda bi, hi: (bi, hi, 0)),
        ],
        out_specs=tuple(out_specs),
        compiler_params=pltpu.CompilerParams(
            dimension_semantics=("parallel", "parallel")),
    )(pred, tgt)

    if ohem_live:
        num_parts, den_parts, loss = outs
    else:
        num_parts, den_parts = outs

    num0 = jnp.sum(num_parts)
    den0 = jnp.sum(den_parts)           # == number of non-ignored pixels
    base = num0 / den0                  # CrossEntropyLoss(reduction='mean', ignore_index)

    if not ohem_live:
        # min_kept > num_valid always holds (or min_kept <= 0): keep everything.
        return base

    num_valid = den0
    k = min(n, min_kept)
    loss_flat = loss.reshape(-1)
    # k-th largest loss == -log of the k-th smallest target prob (ignored pixels
    # carry loss 0, i.e. prob masked_fill_(~valid, 1) in the reference).
    kth_loss = jax.lax.top_k(loss_flat, k)[0][k - 1]
    # TODO(synk): replace lax.top_k with a streaming histogram selection
    # (O(N), fuseable into the pixel kernel) for very large min_kept.
    neg_log_thresh = jnp.float32(-math.log(thresh)) if thresh > 0 else jnp.float32(jnp.inf)
    # prob-space: threshold = max(kth_prob, thresh)  ->  loss-space: min(...).
    thr_loss = jnp.minimum(kth_loss, neg_log_thresh)
    thr_arr = jnp.reshape(thr_loss, (1, 1)).astype(jnp.float32)

    num1_parts, den1_parts = pl.pallas_call(
        functools.partial(_ohem_keep_kernel, ignore_index=ignore_index),
        out_shape=(jax.ShapeDtypeStruct((b, nh, 1, 1), jnp.float32),
                   jax.ShapeDtypeStruct((b, nh, 1, 1), jnp.float32)),
        grid=(b, nh),
        in_specs=[
            pl.BlockSpec(memory_space=pltpu.MemorySpace.SMEM),  # loss-space threshold
            pix_spec,                                           # loss
            pl.BlockSpec((None, tile_h, w), lambda bi, hi: (bi, hi, 0)),  # target
        ],
        out_specs=(part_spec, part_spec),
        compiler_params=pltpu.CompilerParams(
            dimension_semantics=("parallel", "parallel")),
    )(thr_arr, loss, tgt)

    num1 = jnp.sum(num1_parts)
    den1 = jnp.sum(den1_parts)
    ohem_loss = num1 / den1

    apply_ohem = jnp.logical_and(num_valid >= min_kept, num_valid > 0)
    return jnp.where(apply_ohem, ohem_loss, base)


def _reference(pred, target, *, ignore_index, thresh, min_kept):
    """Pure-JAX reference following the PyTorch OhemCrossEntropy forward."""
    b, c, h, w = pred.shape
    n = b * h * w
    tflat = target.reshape(-1).astype(jnp.int32)
    valid = tflat != ignore_index
    t0 = jnp.where(valid, tflat, 0)
    logits = jnp.transpose(pred.astype(jnp.float32), (1, 0, 2, 3)).reshape(c, n)
    logp = jax.nn.log_softmax(logits, axis=0)
    idx = jnp.arange(n)
    nll = -logp[t0, idx]
    prob_t = jnp.where(valid, jnp.exp(logp[t0, idx]), 1.0)
    num_valid = jnp.sum(valid)
    kept = jnp.ones_like(valid)
    if min_kept > 0 and min_kept <= n:
        kth = jnp.sort(prob_t)[min(n, min_kept) - 1]
        thr = jnp.where(kth > thresh, kth, jnp.float32(thresh))
        apply = jnp.logical_and(num_valid >= min_kept, num_valid > 0)
        kept = jnp.where(apply, prob_t <= thr, kept)
    wm = jnp.logical_and(valid, kept).astype(jnp.float32)
    return jnp.sum(nll * wm) / jnp.sum(wm)


if __name__ == "__main__":
    key = jax.random.PRNGKey(0)
    b, c, h, w = 2, 19, 16, 16          # 19 classes, matching the module's weight table
    k1, k2, k3 = jax.random.split(key, 3)

    pred = jax.random.normal(k1, (b, c, h, w), dtype=jnp.float32)
    target = jax.random.randint(k2, (b, h, w), 0, c).astype(jnp.int32)
    ignore_mask = jax.random.uniform(k3, (b, h, w)) < 0.1
    target = jnp.where(ignore_mask, jnp.int32(255), target)

    # Case 1: defaults (min_kept=1e6 > N) -> OHEM statically dead, plain masked CE.
    loss1 = jax.block_until_ready(ohem_cross_entropy(pred, target, tile_h=8))
    ref1 = _reference(pred, target, ignore_index=255, thresh=0.7, min_kept=1000000)
    assert jnp.allclose(loss1, ref1, atol=1e-5, rtol=1e-5), (float(loss1), float(ref1))

    # Case 2: small min_kept -> OHEM branch live and firing at runtime
    # (auto-picked tile_h exercises the default tiling path).
    loss2 = jax.block_until_ready(
        ohem_cross_entropy(pred, target, thresh=0.3, min_kept=64))
    ref2 = _reference(pred, target, ignore_index=255, thresh=0.3, min_kept=64)
    assert jnp.allclose(loss2, ref2, atol=1e-4, rtol=1e-4), (float(loss2), float(ref2))

    print("KERNEL_OK")
</pallas_src>

<mosaic_0001>
module attributes {stable_mosaic.version = 11 : i64} {
  func.func @_ohem_pixel_kernel(%arg0: i32, %arg1: i32, %arg2: memref<1x19x8x16xf32, #tpu.memory_space<vmem>>, %arg3: memref<1x8x16xi32, #tpu.memory_space<vmem>>, %arg4: memref<1x1x1x1xf32, #tpu.memory_space<vmem>>, %arg5: memref<1x1x1x1xf32, #tpu.memory_space<vmem>>) attributes {dimension_semantics = [#tpu.dimension_semantics<parallel>, #tpu.dimension_semantics<parallel>], iteration_bounds = array<i64: 2, 2>, scalar_prefetch = 0 : i64, scratch_operands = 0 : i64, tpu.core_type = #tpu.core_type<tc>, window_params = [{transform_indices = @transform_0, window_bounds = array<i64: 1, 19, 8, 16>}, {transform_indices = @transform_1, window_bounds = array<i64: 1, 8, 16>}, {transform_indices = @transform_2, window_bounds = array<i64: 1, 1, 1, 1>}, {transform_indices = @transform_3, window_bounds = array<i64: 1, 1, 1, 1>}]} {
    %c0 = arith.constant 0 : index
    %c0_0 = arith.constant 0 : index
    %c0_1 = arith.constant 0 : index
    %c0_2 = arith.constant 0 : index
    %0 = vector.load %arg2[%c0, %c0_0, %c0_1, %c0_2] : memref<1x19x8x16xf32, #tpu.memory_space<vmem>>, vector<1x19x8x16xf32>
    %1 = vector.shape_cast %0 : vector<1x19x8x16xf32> to vector<19x8x16xf32>
    %c0_3 = arith.constant 0 : index
    %c0_4 = arith.constant 0 : index
    %c0_5 = arith.constant 0 : index
    %2 = vector.load %arg3[%c0_3, %c0_4, %c0_5] : memref<1x8x16xi32, #tpu.memory_space<vmem>>, vector<1x8x16xi32>
    %3 = vector.shape_cast %2 : vector<1x8x16xi32> to vector<8x16xi32>
    %c255_i32 = arith.constant 255 : i32
    %4 = vector.broadcast %c255_i32 : i32 to vector<8x16xi32>
    %5 = arith.cmpi ne, %3, %4 : vector<8x16xi32>
    %c0_i32 = arith.constant 0 : i32
    %6 = vector.broadcast %c0_i32 : i32 to vector<8x16xi32>
    %7 = arith.select %5, %3, %6 : vector<8x16xi1>, vector<8x16xi32>
    %cst = arith.constant dense<0xFF800000> : vector<8x16xf32>
    %8 = vector.multi_reduction <maximumf>, %1, %cst [0] : vector<19x8x16xf32> to vector<8x16xf32>
    %9 = vector.shape_cast %8 : vector<8x16xf32> to vector<1x8x16xf32>
    %10 = vector.broadcast %9 : vector<1x8x16xf32> to vector<19x8x16xf32>
    %11 = arith.subf %1, %10 : vector<19x8x16xf32>
    %12 = math.exp %11 : vector<19x8x16xf32>
    %cst_6 = arith.constant dense<0.000000e+00> : vector<8x16xf32>
    %13 = vector.multi_reduction <add>, %12, %cst_6 [0] : vector<19x8x16xf32> to vector<8x16xf32>
    %14 = tpu.iota {dimensions = array<i32: 0>} : vector<19x8x16xi32>
    %15 = vector.shape_cast %7 : vector<8x16xi32> to vector<1x8x16xi32>
    %16 = vector.broadcast %15 : vector<1x8x16xi32> to vector<19x8x16xi32>
    %17 = arith.cmpi eq, %14, %16 : vector<19x8x16xi32>
    %cst_7 = arith.constant 0.000000e+00 : f32
    %18 = vector.broadcast %cst_7 : f32 to vector<19x8x16xf32>
    %19 = arith.select %17, %1, %18 : vector<19x8x16xi1>, vector<19x8x16xf32>
    %cst_8 = arith.constant dense<0.000000e+00> : vector<8x16xf32>
    %20 = vector.multi_reduction <add>, %19, %cst_8 [0] : vector<19x8x16xf32> to vector<8x16xf32>
    %21 = math.log %13 : vector<8x16xf32>
    %22 = arith.addf %8, %21 : vector<8x16xf32>
    %23 = arith.subf %22, %20 : vector<8x16xf32>
    %cst_9 = arith.constant 0.000000e+00 : f32
    %24 = vector.broadcast %cst_9 : f32 to vector<8x16xf32>
    %25 = arith.select %5, %23, %24 : vector<8x16xi1>, vector<8x16xf32>
    %26 = vector.shape_cast %25 : vector<8x16xf32> to vector<1x8x16xf32>
    %cst_10 = arith.constant dense<0.000000e+00> : vector<1xf32>
    %27 = vector.multi_reduction <add>, %26, %cst_10 [1, 2] : vector<1x8x16xf32> to vector<1xf32>
    %28 = vector.shape_cast %27 : vector<1xf32> to vector<1x1x1xf32>
    %29 = vector.extract %28[0, 0, 0] : f32 from vector<1x1x1xf32>
    %30 = vector.broadcast %29 : f32 to vector<1x1xf32>
    %c0_11 = arith.constant 0 : index
    %c0_12 = arith.constant 0 : index
    %c0_13 = arith.constant 0 : index
    %c0_14 = arith.constant 0 : index
    %31 = vector.load %arg4[%c0_11, %c0_12, %c0_13, %c0_14] : memref<1x1x1x1xf32, #tpu.memory_space<vmem>>, vector<1x1x1x1xf32>
    %32 = vector.shape_cast %31 : vector<1x1x1x1xf32> to vector<1x1xf32>
    %33 = vector.shape_cast %30 : vector<1x1xf32> to vector<1x1x1x1xf32>
    tpu.vector_store %arg4[%c0_11, %c0_12, %c0_13, %c0_14], %33 {strides = array<i32>} : memref<1x1x1x1xf32, #tpu.memory_space<vmem>>, vector<1x1x1x1xf32>,
    %34 = arith.extui %5 : vector<8x16xi1> to vector<8x16xi32>
    %35 = arith.sitofp %34 : vector<8x16xi32> to vector<8x16xf32>
    %36 = vector.shape_cast %35 : vector<8x16xf32> to vector<1x8x16xf32>
    %cst_15 = arith.constant dense<0.000000e+00> : vector<1xf32>
    %37 = vector.multi_reduction <add>, %36, %cst_15 [1, 2] : vector<1x8x16xf32> to vector<1xf32>
    %38 = vector.shape_cast %37 : vector<1xf32> to vector<1x1x1xf32>
    %39 = vector.extract %38[0, 0, 0] : f32 from vector<1x1x1xf32>
    %40 = vector.broadcast %39 : f32 to vector<1x1xf32>
    %c0_16 = arith.constant 0 : index
    %c0_17 = arith.constant 0 : index
    %c0_18 = arith.constant 0 : index
    %c0_19 = arith.constant 0 : index
    %41 = vector.load %arg5[%c0_16, %c0_17, %c0_18, %c0_19] : memref<1x1x1x1xf32, #tpu.memory_space<vmem>>, vector<1x1x1x1xf32>
    %42 = vector.shape_cast %41 : vector<1x1x1x1xf32> to vector<1x1xf32>
    %43 = vector.shape_cast %40 : vector<1x1xf32> to vector<1x1x1x1xf32>
    tpu.vector_store %arg5[%c0_16, %c0_17, %c0_18, %c0_19], %43 {strides = array<i32>} : memref<1x1x1x1xf32, #tpu.memory_space<vmem>>, vector<1x1x1x1xf32>,
    return
  }
  func.func @transform_0(%arg0: i32, %arg1: i32) -> (i32, i32, i32, i32) {
    %c0_i32 = arith.constant 0 : i32
    %c0_i32_0 = arith.constant 0 : i32
    %c0_i32_1 = arith.constant 0 : i32
    return %arg0, %c0_i32, %arg1, %c0_i32_0 : i32, i32, i32, i32
  }
  func.func @transform_1(%arg0: i32, %arg1: i32) -> (i32, i32, i32) {
    %c0_i32 = arith.constant 0 : i32
    %c0_i32_0 = arith.constant 0 : i32
    return %arg0, %arg1, %c0_i32 : i32, i32, i32
  }
  func.func @transform_2(%arg0: i32, %arg1: i32) -> (i32, i32, i32, i32) {
    %c0_i32 = arith.constant 0 : i32
    %c0_i32_0 = arith.constant 0 : i32
    %c0_i32_1 = arith.constant 0 : i32
    return %arg0, %arg1, %c0_i32, %c0_i32_0 : i32, i32, i32, i32
  }
  func.func @transform_3(%arg0: i32, %arg1: i32) -> (i32, i32, i32, i32) {
    %c0_i32 = arith.constant 0 : i32
    %c0_i32_0 = arith.constant 0 : i32
    %c0_i32_1 = arith.constant 0 : i32
    return %arg0, %arg1, %c0_i32, %c0_i32_0 : i32, i32, i32, i32
  }
}

</mosaic_0001>

<llo_original>
// kernel: tpu_custom_call.1
$region0: #{tpu_custom_call.1}
  #allocation0 [shape = 'u32[]', space=smem, size = 0x4, offset = 0x4, fixed_abs, tag = 'smem constant byte address 0x4 - core index']
  #allocation1 [shape = 'u32[144,128]{1,0:T(1,128)}', space=vmem, size = 0x12000, scoped, tag = 'internal scratch']
  %s0 = inlined_call_operand.vmem [shape: f32[2,19,16,16], index: 0, kind: input, shape index: {}]
  %s1 = inlined_call_operand.vmem [shape: s32[2,16,16], index: 1, kind: input, shape index: {}]
  %s2 = inlined_call_operand.vmem [shape: f32[2,2,1,1], index: 2, kind: output, shape index: {0}]
  %s3 = inlined_call_operand.vmem [shape: f32[2,2,1,1], index: 3, kind: output, shape index: {1}]
  %4 = xla_tuple %s2, %s3
  %s5 = sld [smem:[#allocation0]]
  $region87: #{tpu_custom_call.1} parent=0
    _
  %s7 = ssub.s32 1, %s5
  %s8 = scalar_select 0, %s7, %s5
  $region1: #{tpu_custom_call.1} parent=0
    #allocation2 [shape = 'u8[155648]{0}', space=vmem, size = 0x26000, scoped, tag = 'input window, operand 0']
    loop: start=0, step=1, limit=6
    $region2: #{tpu_custom_call.1} parent=1 // loop_pre_header
      _
    $region3: #{tpu_custom_call.1} parent=1 // loop_header
      %s10 = sphi 0, %s14
      %p11 = scmp.ge.s32.totalorder %s10, 6
      %s17 = sphi 0, %s29
      %s18 = sphi 0, %s25
      %s19 = sphi 0, %s17
      %s20 = sphi 0, %s18
      %s21 = sphi 0, %s19
      %s22 = sphi 0, %s20
      %s34 = sphi 0, %s36
      %s37 = sphi 0, %s34
      %s38 = sphi 0, %s37
      %s54 = sphi 0, %s38
      %s62 = sphi 0, %s64
      %s65 = sphi 0, %s62
      %s66 = sphi 0, %s65
      %s82 = sphi 0, %s66
      %s90 = sphi 0, %s92
      %s93 = sphi 0, %s90
      %s94 = sphi 0, %s93
      %s110 = sphi 0, %s94
      %s118 = sphi 0, %s120
      %s121 = sphi 0, %s118
      %s122 = sphi 0, %s121
      %s138 = sphi 0, %s122
    $region4: #{tpu_custom_call.1} parent=1 // loop_header_branch
      %13 = sbr.rel (%p11) target = $region8
    $region5: #{tpu_custom_call.1} parent=1 // loop_body
      %s15 = ssub.s32 %s10, 1
      %s16 = ssub.s32 %s10, 2
      %s23 = sadd.s32 1, %s18
      %p24 = scmp.ge.s32.totalorder %s23, 2
      %s25 = scalar_select %p24, 0, %s23
      %s26 = sadd.s32 1, %s17
      %s27 = scalar_select %p24, %s26, %s17
      %p28 = scmp.ge.s32.totalorder %s27, 2
      %s29 = scalar_select %p28, 0, %s27
      %s30 = ssub.s32 %s17, %s29
      %s31 = ssub.s32 %s18, %s25
      %s32 = sor.u32 %s30, %s31
      %p33 = scmp.eq.s32.totalorder %s32, 0
      %s35 = sadd.s32 %s34, 1
      %s36 = scalar_select %p33, %s34, %s35
      %p39 = pneg %p33
      %p40 = scmp.eq.s32.totalorder %s10, 3
      %p41 = por %p39, %p40
      %p42 = scmp.ne.s32.totalorder %s34, %s37
      %p43 = scmp.eq.s32.totalorder %s10, 0
      %p44 = por %p42, %p43
      %p45 = scmp.ne.s32.totalorder %s34, %s37
      %p46 = scmp.eq.s32.totalorder %s15, 3
      %p47 = por %p45, %p46
      %p48 = scmp.ne.s32.totalorder %s37, %s38
      %p49 = scmp.eq.s32.totalorder %s15, 0
      %p50 = por %p48, %p49
      %p51 = scmp.ne.s32.totalorder %s37, %s38
      %p52 = scmp.eq.s32.totalorder %s16, 3
      %p53 = por %p51, %p52
      %p55 = scmp.ne.s32.totalorder %s38, %s54
      %p56 = scmp.eq.s32.totalorder %s16, 0
      %p57 = por %p55, %p56
      %s58 = ssub.s32 %s17, %s29
      %s59 = ssub.s32 %s18, %s25
      %s60 = sor.u32 %s58, %s59
      %p61 = scmp.eq.s32.totalorder %s60, 0
      %s63 = sadd.s32 %s62, 1
      %s64 = scalar_select %p61, %s62, %s63
      %p67 = pneg %p61
      %p68 = scmp.eq.s32.totalorder %s10, 3
      %p69 = por %p67, %p68
      %p70 = scmp.ne.s32.totalorder %s62, %s65
      %p71 = scmp.eq.s32.totalorder %s10, 0
      %p72 = por %p70, %p71
      %p73 = scmp.ne.s32.totalorder %s62, %s65
      %p74 = scmp.eq.s32.totalorder %s15, 3
      %p75 = por %p73, %p74
      %p76 = scmp.ne.s32.totalorder %s65, %s66
      %p77 = scmp.eq.s32.totalorder %s15, 0
      %p78 = por %p76, %p77
      %p79 = scmp.ne.s32.totalorder %s65, %s66
      %p80 = scmp.eq.s32.totalorder %s16, 3
      %p81 = por %p79, %p80
      %p83 = scmp.ne.s32.totalorder %s66, %s82
      %p84 = scmp.eq.s32.totalorder %s16, 0
      %p85 = por %p83, %p84
      %s86 = ssub.s32 %s17, %s29
      %s87 = ssub.s32 %s18, %s25
      %s88 = sor.u32 %s86, %s87
      %p89 = scmp.eq.s32.totalorder %s88, 0
      %s91 = sadd.s32 %s90, 1
      %s92 = scalar_select %p89, %s90, %s91
      %p95 = pneg %p89
      %p96 = scmp.eq.s32.totalorder %s10, 3
      %p97 = por %p95, %p96
      %p98 = scmp.ne.s32.totalorder %s90, %s93
      %p99 = scmp.eq.s32.totalorder %s10, 0
      %p100 = por %p98, %p99
      %p101 = scmp.ne.s32.totalorder %s90, %s93
      %p102 = scmp.eq.s32.totalorder %s15, 3
      %p103 = por %p101, %p102
      %p104 = scmp.ne.s32.totalorder %s93, %s94
      %p105 = scmp.eq.s32.totalorder %s15, 0
      %p106 = por %p104, %p105
      %p107 = scmp.ne.s32.totalorder %s93, %s94
      %p108 = scmp.eq.s32.totalorder %s16, 3
      %p109 = por %p107, %p108
      %p111 = scmp.ne.s32.totalorder %s94, %s110
      %p112 = scmp.eq.s32.totalorder %s16, 0
      %p113 = por %p111, %p112
      %s114 = ssub.s32 %s17, %s29
      %s115 = ssub.s32 %s18, %s25
      %s116 = sor.u32 %s114, %s115
      %p117 = scmp.eq.s32.totalorder %s116, 0
      %s119 = sadd.s32 %s118, 1
      %s120 = scalar_select %p117, %s118, %s119
      %p123 = pneg %p117
      %p124 = scmp.eq.s32.totalorder %s10, 3
      %p125 = por %p123, %p124
      %p126 = scmp.ne.s32.totalorder %s118, %s121
      %p127 = scmp.eq.s32.totalorder %s10, 0
      %p128 = por %p126, %p127
      %p129 = scmp.ne.s32.totalorder %s118, %s121
      %p130 = scmp.eq.s32.totalorder %s15, 3
      %p131 = por %p129, %p130
      %p132 = scmp.ne.s32.totalorder %s121, %s122
      %p133 = scmp.eq.s32.totalorder %s15, 0
      %p134 = por %p132, %p133
      %p135 = scmp.ne.s32.totalorder %s121, %s122
      %p136 = scmp.eq.s32.totalorder %s16, 3
      %p137 = por %p135, %p136
      %p139 = scmp.ne.s32.totalorder %s122, %s138
      %p140 = scmp.eq.s32.totalorder %s16, 0
      %p141 = por %p139, %p140
      %p142 = scmp.le.s32.totalorder 1, %s10
      %p143 = scmp.lt.s32.totalorder %s10, 5
      %p144 = pnand %p142, %p143
      %p145 = pneg %p144
      // Predicated region
      $region9: #{tpu_custom_call.1} parent=5 // pred_check
        _
      $region10: #{tpu_custom_call.1} parent=5 // pred_check_branch
        %147 = sbr.rel (%p144) target = $region12
      $region11: #{tpu_custom_call.1} parent=5 // pred_region
        %s148 = ssub.s32 %s10, 1
      $region12: #{tpu_custom_call.1} parent=5 // pred_fallthru
        _
      %p149 = scmp.lt.s32.totalorder %s10, 4
      // Predicated region
      $region13: #{tpu_custom_call.1} parent=5 // pred_check
        %p150 = pneg %p149
      $region14: #{tpu_custom_call.1} parent=5 // pred_check_branch
        %152 = sbr.rel (%p150) target = $region16
      $region15: #{tpu_custom_call.1} parent=5 // pred_region
        // Predicated region
        $region17: #{tpu_custom_call.1} parent=15 // pred_check
          %p153 = pneg %p44
        $region18: #{tpu_custom_call.1} parent=15 // pred_check_branch
          %155 = sbr.rel (%p153) target = $region20
        $region19: #{tpu_custom_call.1} parent=15 // pred_region
          %s156 = sand.u32 %s34, 1
          %s157 = sand.u32 %s34, 1
          %s158 = smul.addr %s157, 152
          %s159 = scalar_lea.vmem [#allocation2], %s158
          %s160 = smul.addr %s17, 38
          %s161 = sadd.s32 %s18, %s160
          %s162 = smul.addr %s161, 8
          %s163 = scalar_lea.vmem %s0, %s162
          // Predicated region
          $region21: #{tpu_custom_call.1} parent=19 // pred_check
            _
          $region22: #{tpu_custom_call.1} parent=19 // pred_check_branch
            %165 = sbr.rel (0) target = $region24
          $region23: #{tpu_custom_call.1} parent=19 // pred_region
            // Predicated region
            $region25: #{tpu_custom_call.1} parent=23 // pred_check
              _
            $region26: #{tpu_custom_call.1} parent=23 // pred_check_branch
              %167 = sbr.rel (0) target = $region28
            $region27: #{tpu_custom_call.1} parent=23 // pred_region
              // Predicated region
              $region40: #{tpu_custom_call.1} parent=27 // pred_check
                _
              $region41: #{tpu_custom_call.1} parent=27 // pred_check_branch
                %218 = sbr.rel (0) target = $region43
              $region42: #{tpu_custom_call.1} parent=27 // pred_region
                loop: start=0, step=1, limit=1
                $region44: #{tpu_custom_call.1} parent=42 // loop_pre_header
                  _
                $region45: #{tpu_custom_call.1} parent=42 // loop_header
                  %s220 = sphi 0, %s224
                  %p221 = scmp.ge.s32.totalorder %s220, 1
                  %s225 = sphi %s163, %s163
                  %s226 = sphi %s159, %s159
                $region46: #{tpu_custom_call.1} parent=42 // loop_header_branch
                  %223 = sbr.rel (%p221) target = $region50
                $region47: #{tpu_custom_call.1} parent=42 // loop_body
                  %v227 = vld [vmem:[%s225] sm:$0xff]
                  %228 = vst [vmem:[%s226] sm:$0xff] %v227
                  %v229 = vld [vmem:[%s225 + $0x10] sm:$0xff]
                  %230 = vst [vmem:[%s226 + $0x8] sm:$0xff] %v229
                  %v231 = vld [vmem:[%s225 + $0x20] sm:$0xff]
                  %232 = vst [vmem:[%s226 + $0x10] sm:$0xff] %v231
                  %v233 = vld [vmem:[%s225 + $0x30] sm:$0xff]
                  %234 = vst [vmem:[%s226 + $0x18] sm:$0xff] %v233
                  %v235 = vld [vmem:[%s225 + $0x40] sm:$0xff]
                  %236 = vst [vmem:[%s226 + $0x20] sm:$0xff] %v235
                  %v237 = vld [vmem:[%s225 + $0x50] sm:$0xff]
                  %238 = vst [vmem:[%s226 + $0x28] sm:$0xff] %v237
                  %v239 = vld [vmem:[%s225 + $0x60] sm:$0xff]
                  %240 = vst [vmem:[%s226 + $0x30] sm:$0xff] %v239
                  %v241 = vld [vmem:[%s225 + $0x70] sm:$0xff]
                  %242 = vst [vmem:[%s226 + $0x38] sm:$0xff] %v241
                  %v243 = vld [vmem:[%s225 + $0x80] sm:$0xff]
                  %244 = vst [vmem:[%s226 + $0x40] sm:$0xff] %v243
                  %v245 = vld [vmem:[%s225 + $0x90] sm:$0xff]
                  %246 = vst [vmem:[%s226 + $0x48] sm:$0xff] %v245
                  %v247 = vld [vmem:[%s225 + $0xa0] sm:$0xff]
                  %248 = vst [vmem:[%s226 + $0x50] sm:$0xff] %v247
                  %v249 = vld [vmem:[%s225 + $0xb0] sm:$0xff]
                  %250 = vst [vmem:[%s226 + $0x58] sm:$0xff] %v249
                  %v251 = vld [vmem:[%s225 + $0xc0] sm:$0xff]
                  %252 = vst [vmem:[%s226 + $0x60] sm:$0xff] %v251
                  %v253 = vld [vmem:[%s225 + $0xd0] sm:$0xff]
                  %254 = vst [vmem:[%s226 + $0x68] sm:$0xff] %v253
                  %v255 = vld [vmem:[%s225 + $0xe0] sm:$0xff]
                  %256 = vst [vmem:[%s226 + $0x70] sm:$0xff] %v255
                  %v257 = vld [vmem:[%s225 + $0xf0] sm:$0xff]
                  %258 = vst [vmem:[%s226 + $0x78] sm:$0xff] %v257
                  %v259 = vld [vmem:[%s225 + $0x100] sm:$0xff]
                  %260 = vst [vmem:[%s226 + $0x80] sm:$0xff] %v259
                  %v261 = vld [vmem:[%s225 + $0x110] sm:$0xff]
                  %262 = vst [vmem:[%s226 + $0x88] sm:$0xff] %v261
                  %v263 = vld [vmem:[%s225 + $0x120] sm:$0xff]
                  %264 = vst [vmem:[%s226 + $0x90] sm:$0xff] %v263
                $region48: #{tpu_custom_call.1} parent=42 // loop_footer
                  %s224 = sadd.s32 1, %s220
                $region49: #{tpu_custom_call.1} parent=42 // loop_footer_branch
                  %219 = sbr.rel target = $region45
                $region50: #{tpu_custom_call.1} parent=42 // loop_exit
                  _
              $region43: #{tpu_custom_call.1} parent=27 // pred_fallthru
                _
              // Predicated region
              $region51: #{tpu_custom_call.1} parent=27 // pred_check
                _
              $region52: #{tpu_custom_call.1} parent=27 // pred_check_branch
                %266 = sbr.rel target = $region54
              $region53: #{tpu_custom_call.1} parent=27 // pred_region
                _
              $region54: #{tpu_custom_call.1} parent=27 // pred_fallthru
                _
            $region28: #{tpu_custom_call.1} parent=23 // pred_fallthru
              _
            // Predicated region
            $region29: #{tpu_custom_call.1} parent=23 // pred_check
              _
            $region30: #{tpu_custom_call.1} parent=23 // pred_check_branch
              %169 = sbr.rel target = $region32
            $region31: #{tpu_custom_call.1} parent=23 // pred_region
              loop: start=0, step=1, limit=1
              $region33: #{tpu_custom_call.1} parent=31 // loop_pre_header
                _
              $region34: #{tpu_custom_call.1} parent=31 // loop_header
                %s172 = sphi 0, %s176
                %p173 = scmp.ge.s32.totalorder %s172, 1
                %s177 = sphi %s163, %s163
                %s178 = sphi %s159, %s159
              $region35: #{tpu_custom_call.1} parent=31 // loop_header_branch
                %175 = sbr.rel (%p173) target = $region39
              $region36: #{tpu_custom_call.1} parent=31 // loop_body
                %v179 = vld [vmem:[%s177] sm:$0xff]
                %180 = vst [vmem:[%s178] sm:$0xff] %v179
                %v181 = vld [vmem:[%s177 + $0x10] sm:$0xff]
                %182 = vst [vmem:[%s178 + $0x8] sm:$0xff] %v181
                %v183 = vld [vmem:[%s177 + $0x20] sm:$0xff]
                %184 = vst [vmem:[%s178 + $0x10] sm:$0xff] %v183
                %v185 = vld [vmem:[%s177 + $0x30] sm:$0xff]
                %186 = vst [vmem:[%s178 + $0x18] sm:$0xff] %v185
                %v187 = vld [vmem:[%s177 + $0x40] sm:$0xff]
                %188 = vst [vmem:[%s178 + $0x20] sm:$0xff] %v187
                %v189 = vld [vmem:[%s177 + $0x50] sm:$0xff]
                %190 = vst [vmem:[%s178 + $0x28] sm:$0xff] %v189
                %v191 = vld [vmem:[%s177 + $0x60] sm:$0xff]
                %192 = vst [vmem:[%s178 + $0x30] sm:$0xff] %v191
                %v193 = vld [vmem:[%s177 + $0x70] sm:$0xff]
                %194 = vst [vmem:[%s178 + $0x38] sm:$0xff] %v193
                %v195 = vld [vmem:[%s177 + $0x80] sm:$0xff]
                %196 = vst [vmem:[%s178 + $0x40] sm:$0xff] %v195
                %v197 = vld [vmem:[%s177 + $0x90] sm:$0xff]
                %198 = vst [vmem:[%s178 + $0x48] sm:$0xff] %v197
                %v199 = vld [vmem:[%s177 + $0xa0] sm:$0xff]
                %200 = vst [vmem:[%s178 + $0x50] sm:$0xff] %v199
                %v201 = vld [vmem:[%s177 + $0xb0] sm:$0xff]
                %202 = vst [vmem:[%s178 + $0x58] sm:$0xff] %v201
                %v203 = vld [vmem:[%s177 + $0xc0] sm:$0xff]
                %204 = vst [vmem:[%s178 + $0x60] sm:$0xff] %v203
                %v205 = vld [vmem:[%s177 + $0xd0] sm:$0xff]
                %206 = vst [vmem:[%s178 + $0x68] sm:$0xff] %v205
                %v207 = vld [vmem:[%s177 + $0xe0] sm:$0xff]
                %208 = vst [vmem:[%s178 + $0x70] sm:$0xff] %v207
                %v209 = vld [vmem:[%s177 + $0xf0] sm:$0xff]
                %210 = vst [vmem:[%s178 + $0x78] sm:$0xff] %v209
                %v211 = vld [vmem:[%s177 + $0x100] sm:$0xff]
                %212 = vst [vmem:[%s178 + $0x80] sm:$0xff] %v211
                %v213 = vld [vmem:[%s177 + $0x110] sm:$0xff]
                %214 = vst [vmem:[%s178 + $0x88] sm:$0xff] %v213
                %v215 = vld [vmem:[%s177 + $0x120] sm:$0xff]
                %216 = vst [vmem:[%s178 + $0x90] sm:$0xff] %v215
              $region37: #{tpu_custom_call.1} parent=31 // loop_footer
                %s176 = sadd.s32 1, %s172
              $region38: #{tpu_custom_call.1} parent=31 // loop_footer_branch
                %171 = sbr.rel target = $region34
              $region39: #{tpu_custom_call.1} parent=31 // loop_exit
                _
            $region32: #{tpu_custom_call.1} parent=23 // pred_fallthru
              _
          $region24: #{tpu_custom_call.1} parent=19 // pred_fallthru
            _
          %267 = vnop
        $region20: #{tpu_custom_call.1} parent=15 // pred_fallthru
          _
        // Predicated region
        $region55: #{tpu_custom_call.1} parent=15 // pred_check
          %p268 = pneg %p72
        $region56: #{tpu_custom_call.1} parent=15 // pred_check_branch
          %270 = sbr.rel (%p268) target = $region58
        $region57: #{tpu_custom_call.1} parent=15 // pred_region
          %p271 = scmp.lt.s32.totalorder %s17, 1
          %s272 = scalar_select %p271, %s17, 1
          %p273 = scmp.lt.s32.totalorder %s18, 1
          %s274 = scalar_select %p273, %s18, 1
          %s275 = smul.addr %s272, 2
          %s276 = sadd.s32 %s274, %s275
          %s277 = smul.addr %s276, 8
          %s278 = scalar_lea.vmem %s1, %s277
        $region58: #{tpu_custom_call.1} parent=15 // pred_fallthru
          _
      $region16: #{tpu_custom_call.1} parent=5 // pred_fallthru
        _
      %p279 = scmp.le.s32.totalorder 1, %s10
      %p280 = scmp.lt.s32.totalorder %s10, 5
      %p281 = pnand %p279, %p280
      %p282 = pneg %p281
      // Predicated region
      $region59: #{tpu_custom_call.1} parent=5 // pred_check
        _
      $region60: #{tpu_custom_call.1} parent=5 // pred_check_branch
        %284 = sbr.rel (%p281) target = $region62
      $region61: #{tpu_custom_call.1} parent=5 // pred_region
        %s285 = ssub.s32 %s10, 1
        %s286 = sand.u32 %s37, 1
        %s287 = sand.u32 %s37, 1
        %s288 = smul.addr %s287, 152
        %s289 = scalar_lea.vmem [#allocation2], %s288
        // Predicated region
        $region63: #{tpu_custom_call.1} parent=61 // pred_check
          %p290 = pneg %p50
        $region64: #{tpu_custom_call.1} parent=61 // pred_check_branch
          %292 = sbr.rel (%p290) target = $region66
        $region65: #{tpu_custom_call.1} parent=61 // pred_region
          _
        $region66: #{tpu_custom_call.1} parent=61 // pred_fallthru
          _
        %s293 = sand.u32 %s37, 1
        %s294 = sand.u32 %s37, 1
        %s295 = smul.addr %s294, 152
        %s296 = scalar_lea.vmem [#allocation2], %s295
        %p297 = pneg %p50
        %p298 = pneg %p47
        %p299 = scmp.lt.s32.totalorder %s19, 1
        %s300 = scalar_select %p299, %s19, 1
        %p301 = scmp.lt.s32.totalorder %s20, 1
        %s302 = scalar_select %p301, %s20, 1
        %s303 = smul.addr %s300, 2
        %s304 = sadd.s32 %s302, %s303
        %s305 = smul.addr %s304, 8
        %s306 = scalar_lea.vmem %s1, %s305
        %p307 = pneg %p78
        %p308 = pneg %p75
        %p309 = pneg %p106
        %p310 = pneg %p103
        %p311 = scmp.lt.s32.totalorder %s19, 1
        %s312 = scalar_select %p311, %s19, 1
        %p313 = scmp.lt.s32.totalorder %s20, 1
        %s314 = scalar_select %p313, %s20, 1
        %s315 = smul.addr %s312, 2
        %s316 = sadd.s32 %s314, %s315
        %s317 = scalar_lea.vmem %s2, %s316
        %p318 = pneg %p134
        %p319 = pneg %p131
        %p320 = scmp.lt.s32.totalorder %s19, 1
        %s321 = scalar_select %p320, %s19, 1
        %p322 = scmp.lt.s32.totalorder %s20, 1
        %s323 = scalar_select %p322, %s20, 1
        %s324 = smul.addr %s321, 2
        %s325 = sadd.s32 %s323, %s324
        %s326 = scalar_lea.vmem %s3, %s325
        %p327 = scmp.lt.s32.totalorder %s19, 1
        %s328 = scalar_select %p327, %s19, 1
        %p329 = scmp.lt.s32.totalorder %s20, 1
        %s330 = scalar_select %p329, %s20, 1
        %s331 = smul.addr %s328, 2
        %s332 = sadd.s32 %s330, %s331
        %s333 = smul.addr %s332, 8
        %s334 = scalar_lea.vmem %s1, %s333
        %p335 = scmp.lt.s32.totalorder %s19, 1
        %s336 = scalar_select %p335, %s19, 1
        %p337 = scmp.lt.s32.totalorder %s20, 1
        %s338 = scalar_select %p337, %s20, 1
        %s339 = smul.addr %s336, 2
        %s340 = sadd.s32 %s338, %s339
        %s341 = scalar_lea.vmem %s2, %s340
        %p342 = scmp.lt.s32.totalorder %s19, 1
        %s343 = scalar_select %p342, %s19, 1
        %p344 = scmp.lt.s32.totalorder %s20, 1
        %s345 = scalar_select %p344, %s20, 1
        %s346 = smul.addr %s343, 2
        %s347 = sadd.s32 %s345, %s346
        %s348 = scalar_lea.vmem %s3, %s347
        %v349 = vld [vmem:[%s289] sm:$0xff]
        %v350 = vld [vmem:[%s289 + $0x8] sm:$0xff]
        %v351 = vld [vmem:[%s289 + $0x10] sm:$0xff]
        %v352 = vld [vmem:[%s289 + $0x18] sm:$0xff]
        %v353 = vld [vmem:[%s289 + $0x20] sm:$0xff]
        %v354 = vld [vmem:[%s289 + $0x28] sm:$0xff]
        %v355 = vld [vmem:[%s289 + $0x30] sm:$0xff]
        %v356 = vld [vmem:[%s289 + $0x38] sm:$0xff]
        %v357 = vld [vmem:[%s289 + $0x40] sm:$0xff]
        %v358 = vld [vmem:[%s289 + $0x48] sm:$0xff]
        %v359 = vld [vmem:[%s289 + $0x50] sm:$0xff]
        %v360 = vld [vmem:[%s289 + $0x58] sm:$0xff]
        %v361 = vld [vmem:[%s289 + $0x60] sm:$0xff]
        %v362 = vld [vmem:[%s289 + $0x68] sm:$0xff]
        %v363 = vld [vmem:[%s289 + $0x70] sm:$0xff]
        %v364 = vld [vmem:[%s289 + $0x78] sm:$0xff]
        %v365 = vld [vmem:[%s289 + $0x80] sm:$0xff]
        %v366 = vld [vmem:[%s289 + $0x88] sm:$0xff]
        %v367 = vld [vmem:[%s289 + $0x90] sm:$0xff]
        %v368 = vld [vmem:[%s334] sm:$0xff]
        %vm369 = vcmp.ne.s32.totalorder %v368, 255
        %v370 = vsel %vm369, %v368, 0
        %vm371 = vcmask 130048
        %v372 = vsel %vm371, %v349, -inf
        %v373 = vsel %vm371, %v350, -inf
        %v374 = vsel %vm371, %v351, -inf
        %v375 = vsel %vm371, %v352, -inf
        %v376 = vsel %vm371, %v353, -inf
        %v377 = vmax.f32 %v372, %v376
        %v378 = vsel %vm371, %v354, -inf
        %v379 = vmax.f32 %v373, %v378
        %v380 = vsel %vm371, %v355, -inf
        %v381 = vmax.f32 %v374, %v380
        %v382 = vsel %vm371, %v356, -inf
        %v383 = vmax.f32 %v375, %v382
        %v384 = vsel %vm371, %v357, -inf
        %v385 = vmax.f32 %v377, %v384
        %v386 = vsel %vm371, %v358, -inf
        %v387 = vmax.f32 %v379, %v386
        %v388 = vsel %vm371, %v359, -inf
        %v389 = vmax.f32 %v381, %v388
        %v390 = vsel %vm371, %v360, -inf
        %v391 = vmax.f32 %v383, %v390
        %v392 = vsel %vm371, %v361, -inf
        %v393 = vmax.f32 %v385, %v392
        %v394 = vsel %vm371, %v362, -inf
        %v395 = vmax.f32 %v387, %v394
        %v396 = vsel %vm371, %v363, -inf
        %v397 = vmax.f32 %v389, %v396
        %v398 = vsel %vm371, %v364, -inf
        %v399 = vmax.f32 %v391, %v398
        %v400 = vsel %vm371, %v365, -inf
        %v401 = vmax.f32 %v393, %v400
        %v402 = vsel %vm371, %v366, -inf
        %v403 = vmax.f32 %v395, %v402
        %v404 = vsel %vm371, %v367, -inf
        %v405 = vmax.f32 %v397, %v404
        %v406 = vmax.f32 %v401, %v403
        %v407 = vmax.f32 %v405, %v399
        %v408 = vmax.f32 %v406, %v407
        %v409 = vsub.f32 %v349, %v408
        %v410 = vsub.f32 %v350, %v408
        %v411 = vsub.f32 %v351, %v408
        %v412 = vsub.f32 %v352, %v408
        %v413 = vsub.f32 %v353, %v408
        %v414 = vsub.f32 %v354, %v408
        %v415 = vsub.f32 %v355, %v408
        %v416 = vsub.f32 %v356, %v408
        %v417 = vsub.f32 %v357, %v408
        %v418 = vsub.f32 %v358, %v408
        %v419 = vsub.f32 %v359, %v408
        %v420 = vsub.f32 %v360, %v408
        %v421 = vsub.f32 %v361, %v408
        %v422 = vsub.f32 %v362, %v408
        %v423 = vsub.f32 %v363, %v408
        %v424 = vsub.f32 %v364, %v408
        %v425 = vsub.f32 %v365, %v408
        %v426 = vsub.f32 %v366, %v408
        %v427 = vsub.f32 %v367, %v408
        %v428 = vmul.f32 %v409, 1.442695
        %v429 = vpow.pop %v428
        %v430 = vmul.f32 %v410, 1.442695
        %v431 = vpow.pop %v430
        %v432 = vmul.f32 %v411, 1.442695
        %v433 = vpow.pop %v432
        %v434 = vmul.f32 %v412, 1.442695
        %v435 = vpow.pop %v434
        %v436 = vmul.f32 %v413, 1.442695
        %v437 = vpow.pop %v436
        %v438 = vmul.f32 %v414, 1.442695
        %v439 = vpow.pop %v438
        %v440 = vmul.f32 %v415, 1.442695
        %v441 = vpow.pop %v440
        %v442 = vmul.f32 %v416, 1.442695
        %v443 = vpow.pop %v442
        %v444 = vmul.f32 %v417, 1.442695
        %v445 = vpow.pop %v444
        %v446 = vmul.f32 %v418, 1.442695
        %v447 = vpow.pop %v446
        %v448 = vmul.f32 %v419, 1.442695
        %v449 = vpow.pop %v448
        %v450 = vmul.f32 %v420, 1.442695
        %v451 = vpow.pop %v450
        %v452 = vmul.f32 %v421, 1.442695
        %v453 = vpow.pop %v452
        %v454 = vmul.f32 %v422, 1.442695
        %v455 = vpow.pop %v454
        %v456 = vmul.f32 %v423, 1.442695
        %v457 = vpow.pop %v456
        %v458 = vmul.f32 %v424, 1.442695
        %v459 = vpow.pop %v458
        %v460 = vmul.f32 %v425, 1.442695
        %v461 = vpow.pop %v460
        %v462 = vmul.f32 %v426, 1.442695
        %v463 = vpow.pop %v462
        %v464 = vmul.f32 %v427, 1.442695
        %v465 = vpow.pop %v464
        %v466 = vsel %vm371, %v429, 0.0
        %v467 = vsel %vm371, %v431, 0.0
        %v468 = vadd.f32 %v466, %v467
        %v469 = vsel %vm371, %v433, 0.0
        %v470 = vadd.f32 %v468, %v469
        %v471 = vsel %vm371, %v435, 0.0
        %v472 = vadd.f32 %v470, %v471
        %v473 = vsel %vm371, %v437, 0.0
        %v474 = vadd.f32 %v472, %v473
        %v475 = vsel %vm371, %v439, 0.0
        %v476 = vadd.f32 %v474, %v475
        %v477 = vsel %vm371, %v441, 0.0
        %v478 = vadd.f32 %v476, %v477
        %v479 = vsel %vm371, %v443, 0.0
        %v480 = vadd.f32 %v478, %v479
        %v481 = vsel %vm371, %v445, 0.0
        %v482 = vadd.f32 %v480, %v481
        %v483 = vsel %vm371, %v447, 0.0
        %v484 = vadd.f32 %v482, %v483
        %v485 = vsel %vm371, %v449, 0.0
        %v486 = vadd.f32 %v484, %v485
        %v487 = vsel %vm371, %v451, 0.0
        %v488 = vadd.f32 %v486, %v487
        %v489 = vsel %vm371, %v453, 0.0
        %v490 = vadd.f32 %v488, %v489
        %v491 = vsel %vm371, %v455, 0.0
        %v492 = vadd.f32 %v490, %v491
        %v493 = vsel %vm371, %v457, 0.0
        %v494 = vadd.f32 %v492, %v493
        %v495 = vsel %vm371, %v459, 0.0
        %v496 = vadd.f32 %v494, %v495
        %v497 = vsel %vm371, %v461, 0.0
        %v498 = vadd.f32 %v496, %v497
        %v499 = vsel %vm371, %v463, 0.0
        %v500 = vadd.f32 %v498, %v499
        %v501 = vsel %vm371, %v465, 0.0
        %v502 = vadd.f32 %v500, %v501
        %vm503 = vcmp.eq.s32.totalorder %v370, 0
        %vm504 = vcmp.eq.s32.totalorder %v370, 1
        %vm505 = vcmp.eq.s32.totalorder %v370, 2
        %vm506 = vcmp.eq.s32.totalorder %v370, 3
        %vm507 = vcmp.eq.s32.totalorder %v370, 4
        %vm508 = vcmp.eq.s32.totalorder %v370, 5
        %vm509 = vcmp.eq.s32.totalorder %v370, 6
        %vm510 = vcmp.eq.s32.totalorder %v370, 7
        %vm511 = vcmp.eq.s32.totalorder %v370, 8
        %vm512 = vcmp.eq.s32.totalorder %v370, 9
        %vm513 = vcmp.eq.s32.totalorder %v370, 10
        %vm514 = vcmp.eq.s32.totalorder %v370, 11
        %vm515 = vcmp.eq.s32.totalorder %v370, 12
        %vm516 = vcmp.eq.s32.totalorder %v370, 13
        %vm517 = vcmp.eq.s32.totalorder %v370, 14
        %vm518 = vcmp.eq.s32.totalorder %v370, 15
        %vm519 = vcmp.eq.s32.totalorder %v370, 16
        %vm520 = vcmp.eq.s32.totalorder %v370, 17
        %vm521 = vcmp.eq.s32.totalorder %v370, 18
        %v522 = vsel %vm503, %v349, 0.0
        %v523 = vsel %vm504, %v350, 0.0
        %v524 = vsel %vm505, %v351, 0.0
        %v525 = vsel %vm506, %v352, 0.0
        %v526 = vsel %vm507, %v353, 0.0
        %v527 = vsel %vm508, %v354, 0.0
        %v528 = vsel %vm509, %v355, 0.0
        %v529 = vsel %vm510, %v356, 0.0
        %v530 = vsel %vm511, %v357, 0.0
        %v531 = vsel %vm512, %v358, 0.0
        %v532 = vsel %vm513, %v359, 0.0
        %v533 = vsel %vm514, %v360, 0.0
        %v534 = vsel %vm515, %v361, 0.0
        %v535 = vsel %vm516, %v362, 0.0
        %v536 = vsel %vm517, %v363, 0.0
        %v537 = vsel %vm518, %v364, 0.0
        %v538 = vsel %vm519, %v365, 0.0
        %v539 = vsel %vm520, %v366, 0.0
        %v540 = vsel %vm521, %v367, 0.0
        %v541 = vsel %vm371, %v522, 0.0
        %v542 = vsel %vm371, %v523, 0.0
        %v543 = vadd.f32 %v541, %v542
        %v544 = vsel %vm371, %v524, 0.0
        %v545 = vadd.f32 %v543, %v544
        %v546 = vsel %vm371, %v525, 0.0
        %v547 = vadd.f32 %v545, %v546
        %v548 = vsel %vm371, %v526, 0.0
        %v549 = vadd.f32 %v547, %v548
        %v550 = vsel %vm371, %v527, 0.0
        %v551 = vadd.f32 %v549, %v550
        %v552 = vsel %vm371, %v528, 0.0
        %v553 = vadd.f32 %v551, %v552
        %v554 = vsel %vm371, %v529, 0.0
        %v555 = vadd.f32 %v553, %v554
        %v556 = vsel %vm371, %v530, 0.0
        %v557 = vadd.f32 %v555, %v556
        %v558 = vsel %vm371, %v531, 0.0
        %v559 = vadd.f32 %v557, %v558
        %v560 = vsel %vm371, %v532, 0.0
        %v561 = vadd.f32 %v559, %v560
        %v562 = vsel %vm371, %v533, 0.0
        %v563 = vadd.f32 %v561, %v562
        %v564 = vsel %vm371, %v534, 0.0
        %v565 = vadd.f32 %v563, %v564
        %v566 = vsel %vm371, %v535, 0.0
        %v567 = vadd.f32 %v565, %v566
        %v568 = vsel %vm371, %v536, 0.0
        %v569 = vadd.f32 %v567, %v568
        %v570 = vsel %vm371, %v537, 0.0
        %v571 = vadd.f32 %v569, %v570
        %v572 = vsel %vm371, %v538, 0.0
        %v573 = vadd.f32 %v571, %v572
        %v574 = vsel %vm371, %v539, 0.0
        %v575 = vadd.f32 %v573, %v574
        %v576 = vsel %vm371, %v540, 0.0
        %v577 = vadd.f32 %v575, %v576
        %v578 = vlog2.pop %v502
        %v579 = vmul.f32 %v578, 0.6931472
        %v580 = vadd.f32 %v408, %v579
        %v581 = vsub.f32 %v580, %v577
        %v582 = vsel %vm369, %v581, 0.0
        %v583 = vsel %vm371, %v582, 0.0
        %584 = vadd.xlane.f32.xlu0 %v583
        %v585 = vpop.xlane.xlu0 %584
        %v586 = vrot.slane %v585, 4
        %v587 = vadd.f32 %v585, %v586
        %v588 = vrot.slane %v587, 2
        %v589 = vadd.f32 %v587, %v588
        %v590 = vrot.slane %v589, 1
        %v591 = vadd.f32 %v589, %v590
        %s592 = vtos %v591
        %v593 = vstv %s592
        %vm594 = vcmask 0
        %595 = vst.msk [vmem:[%s341] sm:$0x1] %vm594, %v593
        %v596 = vsel %vm369, 1, 0
        %v597 = vcvt.s32.f32 %v596
        %v598 = vsel %vm371, %v597, 0.0
        %599 = vadd.xlane.f32.xlu0 %v598
        %v600 = vpop.xlane.xlu0 %599
        %v601 = vrot.slane %v600, 4
        %v602 = vadd.f32 %v600, %v601
        %v603 = vrot.slane %v602, 2
        %v604 = vadd.f32 %v602, %v603
        %v605 = vrot.slane %v604, 1
        %v606 = vadd.f32 %v604, %v605
        %s607 = vtos %v606
        %v608 = vstv %s607
        %609 = vst.msk [vmem:[%s348] sm:$0x1] %vm594, %v608
        %p610 = scmp.lt.s32.totalorder %s19, 1
        %s611 = scalar_select %p610, %s19, 1
        %p612 = scmp.lt.s32.totalorder %s20, 1
        %s613 = scalar_select %p612, %s20, 1
        %s614 = smul.addr %s611, 2
        %s615 = sadd.s32 %s613, %s614
        %s616 = scalar_lea.vmem %s2, %s615
        %p617 = scmp.lt.s32.totalorder %s19, 1
        %s618 = scalar_select %p617, %s19, 1
        %p619 = scmp.lt.s32.totalorder %s20, 1
        %s620 = scalar_select %p619, %s20, 1
        %s621 = smul.addr %s618, 2
        %s622 = sadd.s32 %s620, %s621
        %s623 = scalar_lea.vmem %s3, %s622
        // Predicated region
        $region67: #{tpu_custom_call.1} parent=61 // pred_check
          %p624 = pneg %p103
        $region68: #{tpu_custom_call.1} parent=61 // pred_check_branch
          %626 = sbr.rel (%p624) target = $region70
        $region69: #{tpu_custom_call.1} parent=61 // pred_region
          _
        $region70: #{tpu_custom_call.1} parent=61 // pred_fallthru
          _
        // Predicated region
        $region71: #{tpu_custom_call.1} parent=61 // pred_check
          %p627 = pneg %p131
        $region72: #{tpu_custom_call.1} parent=61 // pred_check_branch
          %629 = sbr.rel (%p627) target = $region74
        $region73: #{tpu_custom_call.1} parent=61 // pred_region
          _
        $region74: #{tpu_custom_call.1} parent=61 // pred_fallthru
          _
      $region62: #{tpu_custom_call.1} parent=5 // pred_fallthru
        _
      %p630 = scmp.le.s32.totalorder 2, %s10
      // Predicated region
      $region75: #{tpu_custom_call.1} parent=5 // pred_check
        %p631 = pneg %p630
      $region76: #{tpu_custom_call.1} parent=5 // pred_check_branch
        %633 = sbr.rel (%p631) target = $region78
      $region77: #{tpu_custom_call.1} parent=5 // pred_region
        %s634 = ssub.s32 %s10, 2
        // Predicated region
        $region79: #{tpu_custom_call.1} parent=77 // pred_check
          %p635 = pneg %p109
        $region80: #{tpu_custom_call.1} parent=77 // pred_check_branch
          %637 = sbr.rel (%p635) target = $region82
        $region81: #{tpu_custom_call.1} parent=77 // pred_region
          %p638 = scmp.lt.s32.totalorder %s21, 1
          %s639 = scalar_select %p638, %s21, 1
          %p640 = scmp.lt.s32.totalorder %s22, 1
          %s641 = scalar_select %p640, %s22, 1
          %s642 = smul.addr %s639, 2
          %s643 = sadd.s32 %s641, %s642
          %s644 = scalar_lea.vmem %s2, %s643
        $region82: #{tpu_custom_call.1} parent=77 // pred_fallthru
          _
        // Predicated region
        $region83: #{tpu_custom_call.1} parent=77 // pred_check
          %p645 = pneg %p137
        $region84: #{tpu_custom_call.1} parent=77 // pred_check_branch
          %647 = sbr.rel (%p645) target = $region86
        $region85: #{tpu_custom_call.1} parent=77 // pred_region
          %p648 = scmp.lt.s32.totalorder %s21, 1
          %s649 = scalar_select %p648, %s21, 1
          %p650 = scmp.lt.s32.totalorder %s22, 1
          %s651 = scalar_select %p650, %s22, 1
          %s652 = smul.addr %s649, 2
          %s653 = sadd.s32 %s651, %s652
          %s654 = scalar_lea.vmem %s3, %s653
        $region86: #{tpu_custom_call.1} parent=77 // pred_fallthru
          _
      $region78: #{tpu_custom_call.1} parent=5 // pred_fallthru
        _
    $region6: #{tpu_custom_call.1} parent=1 // loop_footer
      %s14 = sadd.s32 1, %s10
    $region7: #{tpu_custom_call.1} parent=1 // loop_footer_branch
      %9 = sbr.rel target = $region3
    $region8: #{tpu_custom_call.1} parent=1 // loop_exit
      _

</llo_original>
